<compile_context>
chip_gen: v7x
topology: tpu7x:2x2x1
jax: 0.10.0
libtpu: 0.0.40
codegen_flags: <defaults>
</compile_context>

<pallas_src>
import jax
import jax.numpy as jnp
from jax import lax
from jax.experimental import pallas as pl
from jax.experimental.pallas import tpu as pltpu

WIDTH_MULT_LIST = [0.25, 0.5, 0.75, 1.0]
WIDTH_MULT = 1.0          # FLAGS.width_mult
EPS = 1e-5                # torch BatchNorm2d default

MIN_GRID_BLOCKS = 8          # target pipeline depth (per-step overhead ~0.35 us -> free)
TARGET_BLOCK_BYTES = 4 << 20  # ~4 MiB input blocks: measured sweet spot of the HBM streaming loop


# --------------------------------------------------------------------------------------
# Kernels
# --------------------------------------------------------------------------------------
def _cbn_fused_kernel(x_ref, gamma_ref, beta_ref, o_ref):
    """One (N, Ct, HW) channel slab: per-channel stats + per-(n,c) affine, fused apply."""
    x = x_ref[...].astype(jnp.float32)                          # upcast once (no-op for f32)
    n, _, hw = x.shape
    inv_count = 1.0 / float(n * hw)

    # Per-channel pivot (sample 0, pixel 0) tames E[x^2]-E[x]^2 cancellation when |mean| >> std.
    pivot = x[0:1, :, 0:1]                                      # (1, Ct, 1)
    xc = x - pivot

    # Lane-axis (XLU) reduction first, then the tiny N reduction; Mosaic fuses the s1/s2
    # traversals so the block is read twice total (stats pass + apply pass), not three times.
    s1 = jnp.sum(jnp.sum(xc, axis=2, keepdims=True), axis=0, keepdims=True)       # (1, Ct, 1)
    s2 = jnp.sum(jnp.sum(xc * xc, axis=2, keepdims=True), axis=0, keepdims=True)  # (1, Ct, 1)
    mean_c = s1 * inv_count
    var = jnp.maximum(s2 * inv_count - mean_c * mean_c, 0.0)    # biased variance (training BN)
    inv_std = lax.rsqrt(var + EPS)
    mean = mean_c + pivot

    # Fold BN + conditional affine into per-(n, c) scale / bias; single fused elementwise pass.
    scale = gamma_ref[...] * inv_std                            # (N, Ct, 1)
    bias = beta_ref[...] - mean * scale                         # (N, Ct, 1)
    o_ref[...] = (x * scale + bias).astype(o_ref.dtype)


def _make_stats_kernel(hw_tile, hw_total):
    """Fallback pass 1: accumulate per-channel shifted sums over HW tiles."""
    needs_mask = (hw_total % hw_tile) != 0

    def kernel(x_ref, s1_ref, s2_ref, pivot_ref):
        hw_i = pl.program_id(1)
        x = x_ref[...].astype(jnp.float32)                      # (N, Ct, HWt)

        @pl.when(hw_i == 0)
        def _():
            s1_ref[...] = jnp.zeros_like(s1_ref)
            s2_ref[...] = jnp.zeros_like(s2_ref)
            pivot_ref[...] = x[0:1, :, 0:1]                     # lane 0 of block 0 is always valid

        xc = x - pivot_ref[...]
        if needs_mask:
            # Last HW block is padded by Pallas: zero padded lanes so they don't pollute the sums.
            lane = lax.broadcasted_iota(jnp.int32, x.shape, 2)
            xc = jnp.where(lane + hw_i * hw_tile < hw_total, xc, 0.0)

        s1_ref[...] += jnp.sum(jnp.sum(xc, axis=2, keepdims=True), axis=0, keepdims=True)
        s2_ref[...] += jnp.sum(jnp.sum(xc * xc, axis=2, keepdims=True), axis=0, keepdims=True)

    return kernel


def _cbn_apply_kernel(x_ref, scale_ref, bias_ref, o_ref):
    """Fallback pass 2: out = x * scale[n,c] + bias[n,c]."""
    x = x_ref[...].astype(jnp.float32)
    o_ref[...] = (x * scale_ref[...] + bias_ref[...]).astype(o_ref.dtype)


# --------------------------------------------------------------------------------------
# VMEM budgeting / tile sizing (generation-aware)
# --------------------------------------------------------------------------------------
def _vmem_limit_bytes():
    cap = None
    try:
        cap = pltpu.get_tpu_info().vmem_capacity_bytes
    except Exception:
        cap = None
    if not cap:
        try:
            kind = jax.devices()[0].device_kind.lower()
        except Exception:
            kind = ""
        cap = (128 << 20) if ("v5" in kind or "v6" in kind) else (64 << 20)
    # Headroom for Mosaic-internal scratch; 96 MiB on 128-MiB chips, 48 MiB on 64-MiB (v7x).
    return min((cap * 3) // 4, 96 << 20)


def _pick_c_tile(N, C, HW, io_itemsize, vmem_limit_bytes):
    """Channel tile for the fused kernel, or None if even the minimal tile blows the budget."""
    sub = max(8, 32 // max(1, io_itemsize))                     # sublane granularity for partials
    # Live bytes per channel: double-buffered in + out (I/O dtype) + ~2 f32-sized block temps.
    per_channel_live = N * HW * (4 * io_itemsize + 2 * 4)
    budget = (vmem_limit_bytes * 3) // 4
    fit = budget // max(1, per_channel_live)

    if fit < min(C, sub):
        return None                                             # -> two-pass fallback
    if C <= sub:
        return C                                                # cannot subdivide below sublanes

    # Pipelining depth: aim for >= MIN_GRID_BLOCKS grid steps (never a single giant slab).
    cap_pipe = max(sub, ((C // MIN_GRID_BLOCKS) // sub) * sub)
    # Block-size cap: keep input blocks around the measured ~4 MiB sweet spot.
    cap_bytes = max(sub, ((TARGET_BLOCK_BYTES // max(1, N * HW * io_itemsize)) // sub) * sub)
    fit_tile = C if fit >= C else max(sub, (fit // sub) * sub)
    c_tile = max(sub, min(fit_tile, cap_pipe, cap_bytes, C))

    # Prefer an even number of blocks so v7x's two TensorCores split the parallel axis evenly.
    nblocks = -(-C // c_tile)
    if nblocks > 1 and nblocks % 2 == 1:
        for t in range(c_tile - sub, sub - 1, -sub):
            if (-(-C // t)) % 2 == 0:
                c_tile = t
                break
    return c_tile


def _pick_fallback_tiles(N, C, HW, io_itemsize, vmem_limit_bytes):
    sub = max(8, 32 // max(1, io_itemsize))
    ct = C if C <= sub else sub
    budget = (vmem_limit_bytes * 3) // 4
    live_per_hw = N * ct * (4 * io_itemsize + 2 * 4)
    cap_fit = budget // max(1, live_per_hw)
    cap_bytes = TARGET_BLOCK_BYTES // max(1, N * ct * io_itemsize)
    hw_tile = min(cap_fit, cap_bytes, HW)
    if hw_tile < HW:
        hw_tile = max(128, (hw_tile // 128) * 128)              # lane-dense HW tiles
    return ct, min(hw_tile, HW)


# --------------------------------------------------------------------------------------
# pallas_call wrappers
# --------------------------------------------------------------------------------------
def _cbn_fused(x_flat, gamma3, beta3, N, C, HW, io_itemsize, vmem_limit, c_tile):
    grid = (pl.cdiv(C, c_tile),)
    cost = pl.CostEstimate(
        flops=7 * N * C * HW,
        transcendentals=C,
        bytes_accessed=2 * N * C * HW * io_itemsize + 2 * N * C * 4)
    return pl.pallas_call(
        _cbn_fused_kernel,
        out_shape=jax.ShapeDtypeStruct((N, C, HW), x_flat.dtype),
        grid=grid,
        in_specs=[
            pl.BlockSpec((N, c_tile, HW), lambda c: (0, c, 0)),
            pl.BlockSpec((N, c_tile, 1), lambda c: (0, c, 0)),
            pl.BlockSpec((N, c_tile, 1), lambda c: (0, c, 0)),
        ],
        out_specs=pl.BlockSpec((N, c_tile, HW), lambda c: (0, c, 0)),
        compiler_params=pltpu.CompilerParams(
            dimension_semantics=("parallel",),                  # channel blocks are independent
            vmem_limit_bytes=vmem_limit,
        ),
        cost_estimate=cost,
    )(x_flat, gamma3, beta3)


def _cbn_two_pass(x_flat, gamma3, beta3, N, C, HW, io_itemsize, vmem_limit,
                  c_tile=None, hw_tile=None):
    ct, hwt = _pick_fallback_tiles(N, C, HW, io_itemsize, vmem_limit)
    if c_tile is not None:
        ct = c_tile
    if hw_tile is not None:
        hwt = hw_tile
    grid = (pl.cdiv(C, ct), pl.cdiv(HW, hwt))

    # Pass 1: per-channel shifted sums (HW is the reduction axis -> last, "arbitrary").
    s_shape = jax.ShapeDtypeStruct((1, C, 1), jnp.float32)
    s_spec = pl.BlockSpec((1, ct, 1), lambda c, h: (0, c, 0))
    s1, s2, pivot = pl.pallas_call(
        _make_stats_kernel(hwt, HW),
        out_shape=(s_shape, s_shape, s_shape),
        grid=grid,
        in_specs=[pl.BlockSpec((N, ct, hwt), lambda c, h: (0, c, h))],
        out_specs=(s_spec, s_spec, s_spec),
        compiler_params=pltpu.CompilerParams(
            dimension_semantics=("parallel", "arbitrary"),
            vmem_limit_bytes=vmem_limit,
        ),
        cost_estimate=pl.CostEstimate(
            flops=4 * N * C * HW, transcendentals=0,
            bytes_accessed=N * C * HW * io_itemsize + 3 * C * 4),
    )(x_flat)

    # Tiny O(N*C) finalize in plain JAX: fold stats + conditional affine into scale/bias.
    inv_count = 1.0 / float(N * HW)
    mean_c = s1 * inv_count
    var = jnp.maximum(s2 * inv_count - mean_c * mean_c, 0.0)
    inv_std = lax.rsqrt(var + EPS)
    mean = mean_c + pivot
    scale = gamma3 * inv_std                                    # (N, C, 1)
    bias = beta3 - mean * scale                                 # (N, C, 1)

    # Pass 2: fused apply (both grid axes independent).
    return pl.pallas_call(
        _cbn_apply_kernel,
        out_shape=jax.ShapeDtypeStruct((N, C, HW), x_flat.dtype),
        grid=grid,
        in_specs=[
            pl.BlockSpec((N, ct, hwt), lambda c, h: (0, c, h)),
            pl.BlockSpec((N, ct, 1), lambda c, h: (0, c, 0)),
            pl.BlockSpec((N, ct, 1), lambda c, h: (0, c, 0)),
        ],
        out_specs=pl.BlockSpec((N, ct, hwt), lambda c, h: (0, c, h)),
        compiler_params=pltpu.CompilerParams(
            dimension_semantics=("parallel", "parallel"),
            vmem_limit_bytes=vmem_limit,
        ),
        cost_estimate=pl.CostEstimate(
            flops=2 * N * C * HW, transcendentals=0,
            bytes_accessed=2 * N * C * HW * io_itemsize + 2 * N * C * 4),
    )(x_flat, scale, bias)


def conditional_batchnorm2d(x, gamma, beta, *, c_tile=None, hw_tile=None, force_two_pass=False):
    """x: (N, C, H, W); gamma/beta: (N, C). Returns (N, C, H, W) in x.dtype (bf16 I/O supported)."""
    N, C, H, W = x.shape
    HW = H * W
    io_itemsize = jnp.dtype(x.dtype).itemsize
    x_flat = x.reshape(N, C, HW)
    gamma3 = gamma.astype(jnp.float32).reshape(N, C, 1)
    beta3 = beta.astype(jnp.float32).reshape(N, C, 1)
    vmem_limit = _vmem_limit_bytes()

    chosen = c_tile if c_tile is not None else _pick_c_tile(N, C, HW, io_itemsize, vmem_limit)
    if force_two_pass or chosen is None:
        out = _cbn_two_pass(x_flat, gamma3, beta3, N, C, HW, io_itemsize, vmem_limit,
                            c_tile=c_tile, hw_tile=hw_tile)
    else:
        out = _cbn_fused(x_flat, gamma3, beta3, N, C, HW, io_itemsize, vmem_limit, chosen)
    return out.reshape(N, C, H, W)


# --------------------------------------------------------------------------------------
# Switchable wrapper + parameter construction (host-side glue, mirrors the nn.Module)
# --------------------------------------------------------------------------------------
def make_switchable_cbn_params(key, num_features_list, num_classes):
    """One Embedding(num_classes, 2*nf) per width; gamma part ~ N(1, 0.02), beta part zeros."""
    tables = []
    for nf in num_features_list:
        key, sub = jax.random.split(key)
        gamma_w = 1.0 + 0.02 * jax.random.normal(sub, (num_classes, nf), dtype=jnp.float32)
        beta_w = jnp.zeros((num_classes, nf), dtype=jnp.float32)
        tables.append(jnp.concatenate([gamma_w, beta_w], axis=1))   # (num_classes, 2*nf)
    return tables


def switchable_cbn_forward(x, label, embed_tables, width_mult=WIDTH_MULT, **kw):
    # python-level switch (mirrors FLAGS.width_mult_list.index(FLAGS.width_mult))
    idx = WIDTH_MULT_LIST.index(width_mult)
    embed = embed_tables[idx]
    nf = embed.shape[1] // 2
    assert x.shape[1] == nf, "input channels must match selected width's num_features"
    gb = embed[label]                      # (N, 2*nf) embedding gather (glue)
    gamma, beta = gb[:, :nf], gb[:, nf:]
    return conditional_batchnorm2d(x, gamma, beta, **kw)


def _reference(x, label, embed_tables, width_mult=WIDTH_MULT):
    idx = WIDTH_MULT_LIST.index(width_mult)
    embed = embed_tables[idx]
    nf = embed.shape[1] // 2
    gb = embed[label]
    gamma, beta = gb[:, :nf], gb[:, nf:]
    mean = jnp.mean(x, axis=(0, 2, 3), keepdims=True)
    var = jnp.mean((x - mean) ** 2, axis=(0, 2, 3), keepdims=True)
    x_hat = (x - mean) / jnp.sqrt(var + EPS)
    return gamma[:, :, None, None] * x_hat + beta[:, :, None, None]


if __name__ == "__main__":
    key = jax.random.PRNGKey(0)
    k_x, k_x2, k_x3, k_lbl, k_par = jax.random.split(key, 5)

    num_classes = 10
    num_features_list = [1, 2, 3, 4]        # per width_mult in WIDTH_MULT_LIST
    N, C, H, W = 2, 4, 16, 16               # C matches width_mult = 1.0 branch

    x = jax.random.normal(k_x, (N, C, H, W), dtype=jnp.float32)
    label = jax.random.randint(k_lbl, (N,), 0, num_classes)
    embed_tables = make_switchable_cbn_params(k_par, num_features_list, num_classes)

    # 1) width_mult = 1.0 branch, fused single-pass kernel.
    out = jax.block_until_ready(switchable_cbn_forward(x, label, embed_tables, width_mult=1.0))
    ref = _reference(x, label, embed_tables, width_mult=1.0)
    assert out.shape == (N, C, H, W)
    assert jnp.allclose(out, ref, atol=1e-4, rtol=1e-4)

    # 2) width_mult = 0.5 branch (exercises the python-level switch; nf = 2).
    x2 = jax.random.normal(k_x2, (N, 2, H, W), dtype=jnp.float32)
    out2 = jax.block_until_ready(switchable_cbn_forward(x2, label, embed_tables, width_mult=0.5))
    ref2 = _reference(x2, label, embed_tables, width_mult=0.5)
    assert jnp.allclose(out2, ref2, atol=1e-4, rtol=1e-4)

    # 3) Two-pass fallback path (stats + apply kernels), forced, multiple HW tiles.
    out3 = jax.block_until_ready(switchable_cbn_forward(
        x, label, embed_tables, width_mult=1.0, force_two_pass=True, hw_tile=128))
    assert jnp.allclose(out3, ref, atol=1e-4, rtol=1e-4)

    # 4) Two-pass fallback with a partial (masked) final HW block: H*W = 144, hw_tile = 128.
    x3 = jax.random.normal(k_x3, (N, C, 12, 12), dtype=jnp.float32)
    out4 = jax.block_until_ready(switchable_cbn_forward(
        x3, label, embed_tables, width_mult=1.0, force_two_pass=True, hw_tile=128))
    ref4 = _reference(x3, label, embed_tables, width_mult=1.0)
    assert jnp.allclose(out4, ref4, atol=1e-4, rtol=1e-4)

    # 5) bf16 activations (halves HBM bytes; kernel keeps f32 math internally).
    x_bf = x.astype(jnp.bfloat16)
    out5 = jax.block_until_ready(switchable_cbn_forward(x_bf, label, embed_tables, width_mult=1.0))
    ref5 = _reference(x_bf.astype(jnp.float32), label, embed_tables, width_mult=1.0)
    assert out5.dtype == jnp.bfloat16
    assert jnp.allclose(out5.astype(jnp.float32), ref5, atol=5e-2, rtol=5e-2)

    print("KERNEL_OK")
</pallas_src>

<mosaic_0001>
module attributes {stable_mosaic.version = 11 : i64} {
  func.func @_cbn_fused_kernel(%arg0: i32, %arg1: memref<2x4x256xf32, #tpu.memory_space<vmem>>, %arg2: memref<2x4x1xf32, #tpu.memory_space<vmem>>, %arg3: memref<2x4x1xf32, #tpu.memory_space<vmem>>, %arg4: memref<2x4x256xf32, #tpu.memory_space<vmem>>) attributes {dimension_semantics = [#tpu.dimension_semantics<parallel>], iteration_bounds = array<i64: 1>, scalar_prefetch = 0 : i64, scratch_operands = 0 : i64, tpu.core_type = #tpu.core_type<tc>, window_params = [{transform_indices = @transform_0, window_bounds = array<i64: 2, 4, 256>}, {transform_indices = @transform_1, window_bounds = array<i64: 2, 4, 1>}, {transform_indices = @transform_2, window_bounds = array<i64: 2, 4, 1>}, {transform_indices = @transform_3, window_bounds = array<i64: 2, 4, 256>}]} {
    %c0 = arith.constant 0 : index
    %c0_0 = arith.constant 0 : index
    %c0_1 = arith.constant 0 : index
    %0 = vector.load %arg1[%c0, %c0_0, %c0_1] : memref<2x4x256xf32, #tpu.memory_space<vmem>>, vector<2x4x256xf32>
    %1 = vector.extract_strided_slice %0 {offsets = [0, 0, 0], sizes = [1, 4, 1], strides = [1, 1, 1]} : vector<2x4x256xf32> to vector<1x4x1xf32>
    %2 = vector.broadcast %1 : vector<1x4x1xf32> to vector<2x4x256xf32>
    %3 = arith.subf %0, %2 : vector<2x4x256xf32>
    %cst = arith.constant dense<0.000000e+00> : vector<2x4xf32>
    %4 = vector.multi_reduction <add>, %3, %cst [2] : vector<2x4x256xf32> to vector<2x4xf32>
    %5 = vector.shape_cast %4 : vector<2x4xf32> to vector<2x4x1xf32>
    %cst_2 = arith.constant dense<0.000000e+00> : vector<4x1xf32>
    %6 = vector.multi_reduction <add>, %5, %cst_2 [0] : vector<2x4x1xf32> to vector<4x1xf32>
    %7 = vector.shape_cast %6 : vector<4x1xf32> to vector<1x4x1xf32>
    %8 = arith.mulf %3, %3 : vector<2x4x256xf32>
    %cst_3 = arith.constant dense<0.000000e+00> : vector<2x4xf32>
    %9 = vector.multi_reduction <add>, %8, %cst_3 [2] : vector<2x4x256xf32> to vector<2x4xf32>
    %10 = vector.shape_cast %9 : vector<2x4xf32> to vector<2x4x1xf32>
    %cst_4 = arith.constant dense<0.000000e+00> : vector<4x1xf32>
    %11 = vector.multi_reduction <add>, %10, %cst_4 [0] : vector<2x4x1xf32> to vector<4x1xf32>
    %12 = vector.shape_cast %11 : vector<4x1xf32> to vector<1x4x1xf32>
    %cst_5 = arith.constant 0.001953125 : f32
    %13 = vector.broadcast %cst_5 : f32 to vector<1x4x1xf32>
    %14 = arith.mulf %7, %13 : vector<1x4x1xf32>
    %cst_6 = arith.constant 0.001953125 : f32
    %15 = vector.broadcast %cst_6 : f32 to vector<1x4x1xf32>
    %16 = arith.mulf %12, %15 : vector<1x4x1xf32>
    %17 = arith.mulf %14, %14 : vector<1x4x1xf32>
    %18 = arith.subf %16, %17 : vector<1x4x1xf32>
    %cst_7 = arith.constant 0.000000e+00 : f32
    %19 = vector.broadcast %cst_7 : f32 to vector<1x4x1xf32>
    %20 = arith.maximumf %18, %19 : vector<1x4x1xf32>
    %cst_8 = arith.constant 9.99999974E-6 : f32
    %21 = vector.broadcast %cst_8 : f32 to vector<1x4x1xf32>
    %22 = arith.addf %20, %21 : vector<1x4x1xf32>
    %23 = math.rsqrt %22 : vector<1x4x1xf32>
    %24 = arith.addf %14, %1 : vector<1x4x1xf32>
    %c0_9 = arith.constant 0 : index
    %c0_10 = arith.constant 0 : index
    %c0_11 = arith.constant 0 : index
    %25 = vector.load %arg2[%c0_9, %c0_10, %c0_11] : memref<2x4x1xf32, #tpu.memory_space<vmem>>, vector<2x4x1xf32>
    %26 = vector.broadcast %23 : vector<1x4x1xf32> to vector<2x4x1xf32>
    %27 = arith.mulf %25, %26 : vector<2x4x1xf32>
    %c0_12 = arith.constant 0 : index
    %c0_13 = arith.constant 0 : index
    %c0_14 = arith.constant 0 : index
    %28 = vector.load %arg3[%c0_12, %c0_13, %c0_14] : memref<2x4x1xf32, #tpu.memory_space<vmem>>, vector<2x4x1xf32>
    %29 = vector.broadcast %24 : vector<1x4x1xf32> to vector<2x4x1xf32>
    %30 = arith.mulf %29, %27 : vector<2x4x1xf32>
    %31 = arith.subf %28, %30 : vector<2x4x1xf32>
    %32 = vector.broadcast %27 : vector<2x4x1xf32> to vector<2x4x256xf32>
    %33 = arith.mulf %0, %32 : vector<2x4x256xf32>
    %34 = vector.broadcast %31 : vector<2x4x1xf32> to vector<2x4x256xf32>
    %35 = arith.addf %33, %34 : vector<2x4x256xf32>
    %c0_15 = arith.constant 0 : index
    %c0_16 = arith.constant 0 : index
    %c0_17 = arith.constant 0 : index
    %36 = vector.load %arg4[%c0_15, %c0_16, %c0_17] : memref<2x4x256xf32, #tpu.memory_space<vmem>>, vector<2x4x256xf32>
    tpu.vector_store %arg4[%c0_15, %c0_16, %c0_17], %35 {strides = array<i32>} : memref<2x4x256xf32, #tpu.memory_space<vmem>>, vector<2x4x256xf32>,
    return
  }
  func.func @transform_0(%arg0: i32) -> (i32, i32, i32) {
    %c0_i32 = arith.constant 0 : i32
    %c0_i32_0 = arith.constant 0 : i32
    %c0_i32_1 = arith.constant 0 : i32
    return %c0_i32, %arg0, %c0_i32_0 : i32, i32, i32
  }
  func.func @transform_1(%arg0: i32) -> (i32, i32, i32) {
    %c0_i32 = arith.constant 0 : i32
    %c0_i32_0 = arith.constant 0 : i32
    %c0_i32_1 = arith.constant 0 : i32
    return %c0_i32, %arg0, %c0_i32_0 : i32, i32, i32
  }
  func.func @transform_2(%arg0: i32) -> (i32, i32, i32) {
    %c0_i32 = arith.constant 0 : i32
    %c0_i32_0 = arith.constant 0 : i32
    %c0_i32_1 = arith.constant 0 : i32
    return %c0_i32, %arg0, %c0_i32_0 : i32, i32, i32
  }
  func.func @transform_3(%arg0: i32) -> (i32, i32, i32) {
    %c0_i32 = arith.constant 0 : i32
    %c0_i32_0 = arith.constant 0 : i32
    %c0_i32_1 = arith.constant 0 : i32
    return %c0_i32, %arg0, %c0_i32_0 : i32, i32, i32
  }
}

</mosaic_0001>

<llo_original>
// kernel: tpu_custom_call.1
$region0: #{tpu_custom_call.1}
  #allocation0 [shape = 'u32[]', space=smem, size = 0x4, offset = 0x4, fixed_abs, tag = 'smem constant byte address 0x4 - core index']
  #allocation1 [shape = 'u32[144,128]{1,0:T(1,128)}', space=vmem, size = 0x12000, scoped, tag = 'internal scratch']
  %s0 = inlined_call_operand.vmem [shape: f32[2,4,256], index: 0, kind: input, shape index: {}]
  %s1 = inlined_call_operand.vmem [shape: f32[2,4,1], index: 1, kind: input, shape index: {}]
  %s2 = inlined_call_operand.vmem [shape: f32[2,4,1], index: 2, kind: input, shape index: {}]
  %s3 = inlined_call_operand.hbm [shape: f32[2,4,256], index: 3, kind: output, shape index: {}]
  %s4 = sld [smem:[#allocation0]]
  $region22: #{tpu_custom_call.1} parent=0
    _
  %s6 = ssub.s32 1, %s4
  %s7 = scalar_select 0, %s6, %s4
  $region1: #{tpu_custom_call.1} parent=0
    #allocation2 [shape = 'u8[8192]{0}', space=vmem, size = 0x2000, scoped, tag = 'output window, operand 0, single buffered']
    #allocation3 [shape = 's32[1]{0}', space=sflag, size = 0x4, scoped, tag = 'scoped memory for tpu_custom_call.1']
    %8 = vsyncpa [#allocation3], 0
    // Predicated region
    $region2: #{tpu_custom_call.1} parent=1 // pred_check
      _
    $region3: #{tpu_custom_call.1} parent=1 // pred_check_branch
      %10 = sbr.rel (0) target = $region5
    $region4: #{tpu_custom_call.1} parent=1 // pred_region
      _
    $region5: #{tpu_custom_call.1} parent=1 // pred_fallthru
      _
    // Predicated region
    $region6: #{tpu_custom_call.1} parent=1 // pred_check
      _
    $region7: #{tpu_custom_call.1} parent=1 // pred_check_branch
      %12 = sbr.rel (0) target = $region9
    $region8: #{tpu_custom_call.1} parent=1 // pred_region
      _
    $region9: #{tpu_custom_call.1} parent=1 // pred_fallthru
      _
    // Predicated region
    $region10: #{tpu_custom_call.1} parent=1 // pred_check
      _
    $region11: #{tpu_custom_call.1} parent=1 // pred_check_branch
      %14 = sbr.rel (0) target = $region13
    $region12: #{tpu_custom_call.1} parent=1 // pred_region
      _
    $region13: #{tpu_custom_call.1} parent=1 // pred_fallthru
      _
    %v15 = vld [vmem:[%s0] sm:$0xff]
    %v16 = vld [vmem:[%s0 + $0x8] sm:$0xff]
    %18 = vset.pattern.permute.xlu0 0
    %19 = vperm.xlu0 %18, %v15
    %v20 = vpop.permute.xlu0 %19
    %v23 = vunpack.c.l.s4 839922192
    %v24 = vunpack.c.0.s8 %v23
    %v25 = vlaneseq
    %v26 = vshrl.u32 %v25, 7
    %v27 = vsub.s32 %v24, %v26
    %v28 = vrot.slane %v20, %v27
    %v29 = vsub.f32 %v15, %v28
    %v30 = vsub.f32 %v16, %v28
    %v33 = vcombine.high %v29, %v29
    %v34 = vcombine.high %v30, %v30
    %vm37 = vcmask 1043456
    %v38 = vsel %vm37, %v29, 0.0
    %v39 = vsel %vm37, %v33, 0.0
    %v40 = vadd.f32 %v38, %v39
    %41 = vadd.xlane.f32.xlu0 %v40
    %v42 = vpop.xlane.xlu0 %41
    %v43 = vsel %vm37, %v30, 0.0
    %v44 = vsel %vm37, %v34, 0.0
    %v45 = vadd.f32 %v43, %v44
    %46 = vadd.xlane.f32.xlu0 %v45
    %v47 = vpop.xlane.xlu0 %46
    %v48 = vsel %vm37, %v42, 0.0
    %v49 = vsel %vm37, %v47, 0.0
    %v50 = vadd.f32 %v48, %v49
    %v51 = vmul.f32 %v29, %v29
    %v52 = vmul.f32 %v30, %v30
    %v55 = vcombine.high %v51, %v51
    %v56 = vcombine.high %v52, %v52
    %v59 = vsel %vm37, %v51, 0.0
    %v60 = vsel %vm37, %v55, 0.0
    %v61 = vadd.f32 %v59, %v60
    %62 = vadd.xlane.f32.xlu0 %v61
    %v63 = vpop.xlane.xlu0 %62
    %v64 = vsel %vm37, %v52, 0.0
    %v65 = vsel %vm37, %v56, 0.0
    %v66 = vadd.f32 %v64, %v65
    %67 = vadd.xlane.f32.xlu0 %v66
    %v68 = vpop.xlane.xlu0 %67
    %v69 = vsel %vm37, %v63, 0.0
    %v70 = vsel %vm37, %v68, 0.0
    %v71 = vadd.f32 %v69, %v70
    %v72 = vmul.f32 %v50, 0.001953125
    %v73 = vmul.f32 %v71, 0.001953125
    %v74 = vmul.f32 %v72, %v72
    %v75 = vsub.f32 %v73, %v74
    %v76 = vmax.f32 %v75, 0.0
    %v77 = vadd.f32 %v76, 1e-05
    %v78 = vrsqrt.pop %v77
    %v79 = vadd.f32 %v72, %v15
    %v80 = vld [vmem:[%s1] sm:$0xf]
    %v81 = vld [vmem:[%s1 + $0x4] sm:$0xf]
    %v82 = vmul.f32 %v80, %v78
    %v83 = vmul.f32 %v81, %v78
    %v84 = vld [vmem:[%s2] sm:$0xf]
    %v85 = vld [vmem:[%s2 + $0x4] sm:$0xf]
    %v86 = vmul.f32 %v79, %v82
    %v87 = vmul.f32 %v79, %v83
    %v88 = vsub.f32 %v84, %v86
    %v89 = vsub.f32 %v85, %v87
    %91 = vset.pattern.permute.xlu0 0
    %92 = vperm.xlu0 %91, %v82
    %v93 = vpop.permute.xlu0 %92
    %95 = vset.pattern.permute.xlu0 0
    %96 = vperm.xlu0 %95, %v83
    %v97 = vpop.permute.xlu0 %96
    %v99 = vunpack.c.l.s4 839922192
    %v100 = vunpack.c.0.s8 %v99
    %v101 = vlaneseq
    %v102 = vshrl.u32 %v101, 7
    %v103 = vsub.s32 %v100, %v102
    %v104 = vrot.slane %v93, %v103
    %v106 = vunpack.c.l.s4 839922192
    %v107 = vunpack.c.0.s8 %v106
    %v108 = vlaneseq
    %v109 = vshrl.u32 %v108, 7
    %v110 = vsub.s32 %v107, %v109
    %v111 = vrot.slane %v97, %v110
    %v114 = vmul.f32 %v15, %v104
    %v115 = vmul.f32 %v16, %v111
    %117 = vset.pattern.permute.xlu0 0
    %118 = vperm.xlu0 %117, %v88
    %v119 = vpop.permute.xlu0 %118
    %121 = vset.pattern.permute.xlu0 0
    %122 = vperm.xlu0 %121, %v89
    %v123 = vpop.permute.xlu0 %122
    %v125 = vunpack.c.l.s4 839922192
    %v126 = vunpack.c.0.s8 %v125
    %v127 = vlaneseq
    %v128 = vshrl.u32 %v127, 7
    %v129 = vsub.s32 %v126, %v128
    %v130 = vrot.slane %v119, %v129
    %v132 = vunpack.c.l.s4 839922192
    %v133 = vunpack.c.0.s8 %v132
    %v134 = vlaneseq
    %v135 = vshrl.u32 %v134, 7
    %v136 = vsub.s32 %v133, %v135
    %v137 = vrot.slane %v123, %v136
    %v140 = vadd.f32 %v114, %v130
    %v141 = vadd.f32 %v115, %v137
    %142 = vst [vmem:[#allocation2] sm:$0xff] %v140
    %143 = vst [vmem:[#allocation2 + $0x8] sm:$0xff] %v141
    // Predicated region
    $region14: #{tpu_custom_call.1} parent=1 // pred_check
      _
    $region15: #{tpu_custom_call.1} parent=1 // pred_check_branch
      %145 = sbr.rel (0) target = $region17
    $region16: #{tpu_custom_call.1} parent=1 // pred_region
      %s147 = ssub.s32 256, 256
      %148 = vsyncadd [#allocation3], %s147
      %s149 = sshll.u32 [#allocation2], 4
      %s150 = int_to_ptr.vmem [resolvable:$true] %s149
      %155 = dma.vmem_to_hbm [thread:$0]  %s150, 256, %s3, [#allocation3], 128, 128, 8
    $region17: #{tpu_custom_call.1} parent=1 // pred_fallthru
      _
    // Predicated region
    $region18: #{tpu_custom_call.1} parent=1 // pred_check
      _
    $region19: #{tpu_custom_call.1} parent=1 // pred_check_branch
      %157 = sbr.rel (0) target = $region21
    $region20: #{tpu_custom_call.1} parent=1 // pred_region
      %158 = dma.done [#allocation3], 256
    $region21: #{tpu_custom_call.1} parent=1 // pred_fallthru
      _
    %159 = vsyncpa [#allocation3], 1

</llo_original>
